<compile_context>
chip_gen: v6e
topology: v6e:2x2x1
jax: 0.10.0
libtpu: 0.0.40
codegen_flags: <defaults>
</compile_context>

<pallas_src>
import jax
import jax.numpy as jnp
from jax import lax
from jax.experimental import pallas as pl
from jax.experimental.pallas import tpu as pltpu


def _round_up(x, m):
    return ((x + m - 1) // m) * m


def _qnet_kernel(ids_ref, num_ref,
                 fused_tab_ref, w1n_ref, b1_ref,
                 w2_ref, b2_ref, w3t_ref, b3_ref,
                 o_ref):
    """One batch tile: fused (embed+fc1) multi-hot matmul -> ReLU -> fc2 -> ReLU -> fc3."""
    tb = num_ref.shape[0]
    n_rows = fused_tab_ref.shape[0]

    # Exact gather+fc1 as a single multi-hot matmul against the fused table.
    # ids are pre-offset so the three vocab ranges are disjoint rows.
    ids = ids_ref[...]                                            # [TB, 3] int32
    iota = lax.broadcasted_iota(jnp.int32, (tb, n_rows), 1)       # [TB, n_rows]
    mh = ((ids[:, 0:1] == iota).astype(jnp.float32)
          + (ids[:, 1:2] == iota).astype(jnp.float32)
          + (ids[:, 2:3] == iota).astype(jnp.float32))            # multi-hot [TB, n_rows]

    h1 = jnp.dot(mh, fused_tab_ref[...], preferred_element_type=jnp.float32)
    h1 = h1 + jnp.dot(num_ref[...], w1n_ref[...], preferred_element_type=jnp.float32)
    h1 = jnp.maximum(h1 + b1_ref[...], 0.0)
    # dropout1: identity (eval mode)

    h2 = jnp.dot(h1, w2_ref[...], preferred_element_type=jnp.float32)
    h2 = jnp.maximum(h2 + b2_ref[...], 0.0)
    # dropout2: identity (eval mode)

    # fc3 with the batch on the lane axis: [1, fc2] x [TB, fc2] contracted on
    # the feature dim -> [1, TB]; lane-dense unmasked store (TB % 128 == 0).
    q = lax.dot_general(w3t_ref[...], h2,
                        dimension_numbers=(((1,), (1,)), ((), ())),
                        preferred_element_type=jnp.float32)       # [1, TB]
    o_ref[...] = q + b3_ref[...]


def qnet_forward(params, id_features_batch, numeric_features_batch, *,
                 batch_tile=512):
    """Equivalent of QNetworkWithEmbeddings.forward (eval mode).

    id_features_batch:      int32   [B, 3] (category_id, sub_category_id, industry_id)
    numeric_features_batch: float32 [B, total_numeric_features]
    returns:                float32 [B, 1]
    """
    B = id_features_batch.shape[0]
    num_numeric = numeric_features_batch.shape[1]

    n_cat, cat_dim = params["emb_cat"].shape
    n_sub, sub_dim = params["emb_sub"].shape
    n_ind, ind_dim = params["emb_ind"].shape

    # ---- batch tiling: TB multiple of 128 (lane-packed output), >=2 steps when
    # ---- the batch allows it so v7x can shard the grid across its 2 TCs. ------
    TB = min(_round_up(batch_tile, 128), _round_up(B, 128))
    half_cap = _round_up(max((B + 1) // 2, 1), 128)
    TB = max(128, min(TB, half_cap))
    B_pad = _round_up(B, TB)
    grid = (B_pad // TB,)
    pad_rows = B_pad - B

    # ids pre-offset into the stacked fused-table row space, padded rows -> 0.
    ids = id_features_batch.astype(jnp.int32)
    ids = ids + jnp.array([[0, n_cat, n_cat + n_sub]], dtype=jnp.int32)
    ids = jnp.pad(ids, ((0, pad_rows), (0, 0)))
    # numeric features kept at their TRUE width (no lane padding).
    num = jnp.pad(numeric_features_batch.astype(jnp.float32), ((0, pad_rows), (0, 0)))

    # ---- fuse embedding + fc1 algebraically (wrapper-side, once) --------------
    w1 = params["w1"]
    o0, o1, o2 = cat_dim, cat_dim + sub_dim, cat_dim + sub_dim + ind_dim
    fused_tab = jnp.concatenate([
        params["emb_cat"] @ w1[:o0],
        params["emb_sub"] @ w1[o0:o1],
        params["emb_ind"] @ w1[o1:o2],
    ], axis=0)                                   # [n_cat+n_sub+n_ind, fc1_units]
    w1n = w1[o2:]                                # [num_numeric, fc1_units]
    w3t = params["w3"].T                         # [1, fc2_units]

    def resident_spec(arr):
        # Grid-invariant block: fetched once, stays VMEM-resident across steps.
        return pl.BlockSpec(arr.shape, lambda i: (0, 0))

    out = pl.pallas_call(
        _qnet_kernel,
        grid=grid,
        in_specs=[
            pl.BlockSpec((TB, 3), lambda i: (i, 0)),             # ids (one block)
            pl.BlockSpec((TB, num_numeric), lambda i: (i, 0)),   # numeric (true width)
            resident_spec(fused_tab),
            resident_spec(w1n),
            resident_spec(params["b1"]),
            resident_spec(params["w2"]),
            resident_spec(params["b2"]),
            resident_spec(w3t),
            resident_spec(params["b3"]),
        ],
        out_specs=pl.BlockSpec((1, TB), lambda i: (0, i)),
        out_shape=jax.ShapeDtypeStruct((1, B_pad), jnp.float32),
        compiler_params=pltpu.CompilerParams(
            # Batch axis is independent -> shard across the 2 TCs on v7x.
            dimension_semantics=("parallel",),
        ),
    )(ids, num, fused_tab, w1n, params["b1"], params["w2"], params["b2"],
      w3t, params["b3"])

    return out[0, :B].reshape(B, 1)


def init_params(key,
                num_categories, num_sub_categories, num_industries,
                cat_embed_dim, sub_cat_embed_dim, ind_embed_dim,
                total_numeric_features, fc1_units=128, fc2_units=32):
    """Deterministic parameter init mimicking PyTorch defaults
    (Embedding ~ N(0,1); Linear ~ U(-1/sqrt(fan_in), 1/sqrt(fan_in))).
    Linear weights stored as [in_features, out_features]."""
    ks = jax.random.split(key, 9)
    total_embed_dim = cat_embed_dim + sub_cat_embed_dim + ind_embed_dim
    fc_input_dim = total_embed_dim + total_numeric_features

    def lin(kw, kb, fan_in, fan_out):
        bound = 1.0 / jnp.sqrt(fan_in)
        w = jax.random.uniform(kw, (fan_in, fan_out), jnp.float32, -bound, bound)
        b = jax.random.uniform(kb, (1, fan_out), jnp.float32, -bound, bound)
        return w, b

    params = {}
    params["emb_cat"] = jax.random.normal(ks[0], (num_categories, cat_embed_dim), jnp.float32)
    params["emb_sub"] = jax.random.normal(ks[1], (num_sub_categories, sub_cat_embed_dim), jnp.float32)
    params["emb_ind"] = jax.random.normal(ks[2], (num_industries, ind_embed_dim), jnp.float32)
    params["w1"], params["b1"] = lin(ks[3], ks[4], fc_input_dim, fc1_units)
    params["w2"], params["b2"] = lin(ks[5], ks[6], fc1_units, fc2_units)
    params["w3"], params["b3"] = lin(ks[7], ks[8], fc2_units, 1)
    return params


def _reference_forward(params, id_features_batch, numeric_features_batch):
    """Pure-JAX reference for correctness checking."""
    cat_embed = jnp.take(params["emb_cat"], id_features_batch[:, 0], axis=0)
    sub_cat_embed = jnp.take(params["emb_sub"], id_features_batch[:, 1], axis=0)
    ind_embed = jnp.take(params["emb_ind"], id_features_batch[:, 2], axis=0)
    x = jnp.concatenate([cat_embed, sub_cat_embed, ind_embed,
                         numeric_features_batch.astype(jnp.float32)], axis=1)
    h1 = jnp.maximum(x @ params["w1"] + params["b1"], 0.0)
    h2 = jnp.maximum(h1 @ params["w2"] + params["b2"], 0.0)
    return h2 @ params["w3"] + params["b3"]


if __name__ == "__main__":
    # Small, self-consistent shapes.
    NUM_CAT, NUM_SUB, NUM_IND = 20, 30, 15
    CAT_DIM, SUB_DIM, IND_DIM = 8, 8, 16
    NUM_NUMERIC = 32
    FC1, FC2 = 128, 32
    B_BIG, B_SMALL = 300, 20

    key = jax.random.PRNGKey(0)
    kp, kid, knum = jax.random.split(key, 3)

    params = init_params(kp, NUM_CAT, NUM_SUB, NUM_IND,
                         CAT_DIM, SUB_DIM, IND_DIM,
                         NUM_NUMERIC, FC1, FC2)

    kc, ks, ki = jax.random.split(kid, 3)
    id_features = jnp.stack([
        jax.random.randint(kc, (B_BIG,), 0, NUM_CAT),
        jax.random.randint(ks, (B_BIG,), 0, NUM_SUB),
        jax.random.randint(ki, (B_BIG,), 0, NUM_IND),
    ], axis=1).astype(jnp.int32)                               # [B_BIG, 3]
    numeric_features = jax.random.normal(knum, (B_BIG, NUM_NUMERIC), jnp.float32)

    ref_big = _reference_forward(params, id_features, numeric_features)
    ref_small = ref_big[:B_SMALL]

    # Single-tile path (B=20 -> TB=128, grid=(1,)).
    out_small = qnet_forward(params, id_features[:B_SMALL], numeric_features[:B_SMALL])
    out_small = jax.block_until_ready(out_small)
    assert out_small.shape == (B_SMALL, 1), out_small.shape
    assert jnp.allclose(out_small, ref_small, atol=1e-4, rtol=1e-4), (
        "Pallas output mismatch vs reference (single tile)")

    # Multi-step batch grid path (B=300, batch_tile=128 -> TB=128, grid=(3,),
    # with row padding and the lane-packed (1, TB) output blocks).
    out_big = qnet_forward(params, id_features, numeric_features, batch_tile=128)
    out_big = jax.block_until_ready(out_big)
    assert out_big.shape == (B_BIG, 1), out_big.shape
    assert jnp.allclose(out_big, ref_big, atol=1e-4, rtol=1e-4), (
        "Pallas output mismatch vs reference (batch-tiled)")

    print("KERNEL_OK")
</pallas_src>

<mosaic_0001>
module attributes {stable_mosaic.version = 11 : i64} {
  func.func @_qnet_kernel(%arg0: i32, %arg1: memref<128x3xi32, #tpu.memory_space<vmem>>, %arg2: memref<128x32xf32, #tpu.memory_space<vmem>>, %arg3: memref<65x128xf32, #tpu.memory_space<vmem>>, %arg4: memref<32x128xf32, #tpu.memory_space<vmem>>, %arg5: memref<1x128xf32, #tpu.memory_space<vmem>>, %arg6: memref<128x32xf32, #tpu.memory_space<vmem>>, %arg7: memref<1x32xf32, #tpu.memory_space<vmem>>, %arg8: memref<1x32xf32, #tpu.memory_space<vmem>>, %arg9: memref<1x1xf32, #tpu.memory_space<vmem>>, %arg10: memref<1x128xf32, #tpu.memory_space<vmem>>) attributes {dimension_semantics = [#tpu.dimension_semantics<parallel>], iteration_bounds = array<i64: 1>, scalar_prefetch = 0 : i64, scratch_operands = 0 : i64, tpu.core_type = #tpu.core_type<tc>, window_params = [{transform_indices = @transform_0, window_bounds = array<i64: 128, 3>}, {transform_indices = @transform_1, window_bounds = array<i64: 128, 32>}, {pipeline_mode = #tpu.pipeline_mode<synchronous>, transform_indices = @transform_2, window_bounds = array<i64: 65, 128>}, {pipeline_mode = #tpu.pipeline_mode<synchronous>, transform_indices = @transform_3, window_bounds = array<i64: 32, 128>}, {pipeline_mode = #tpu.pipeline_mode<synchronous>, transform_indices = @transform_4, window_bounds = array<i64: 1, 128>}, {pipeline_mode = #tpu.pipeline_mode<synchronous>, transform_indices = @transform_5, window_bounds = array<i64: 128, 32>}, {pipeline_mode = #tpu.pipeline_mode<synchronous>, transform_indices = @transform_6, window_bounds = array<i64: 1, 32>}, {pipeline_mode = #tpu.pipeline_mode<synchronous>, transform_indices = @transform_7, window_bounds = array<i64: 1, 32>}, {pipeline_mode = #tpu.pipeline_mode<synchronous>, transform_indices = @transform_8, window_bounds = array<i64: 1, 1>}, {transform_indices = @transform_9, window_bounds = array<i64: 1, 128>}]} {
    %c0 = arith.constant 0 : index
    %c0_0 = arith.constant 0 : index
    %0 = vector.load %arg1[%c0, %c0_0] : memref<128x3xi32, #tpu.memory_space<vmem>>, vector<128x3xi32>
    %1 = tpu.iota {dimensions = array<i32: 1>} : vector<128x65xi32>
    %2 = vector.extract_strided_slice %0 {offsets = [0, 0], sizes = [128, 1], strides = [1, 1]} : vector<128x3xi32> to vector<128x1xi32>
    %3 = vector.broadcast %2 : vector<128x1xi32> to vector<128x65xi32>
    %4 = arith.cmpi eq, %3, %1 : vector<128x65xi32>
    %5 = arith.extui %4 : vector<128x65xi1> to vector<128x65xi32>
    %6 = arith.sitofp %5 : vector<128x65xi32> to vector<128x65xf32>
    %7 = vector.extract_strided_slice %0 {offsets = [0, 1], sizes = [128, 1], strides = [1, 1]} : vector<128x3xi32> to vector<128x1xi32>
    %8 = vector.broadcast %7 : vector<128x1xi32> to vector<128x65xi32>
    %9 = arith.cmpi eq, %8, %1 : vector<128x65xi32>
    %10 = arith.extui %9 : vector<128x65xi1> to vector<128x65xi32>
    %11 = arith.sitofp %10 : vector<128x65xi32> to vector<128x65xf32>
    %12 = arith.addf %6, %11 : vector<128x65xf32>
    %13 = vector.extract_strided_slice %0 {offsets = [0, 2], sizes = [128, 1], strides = [1, 1]} : vector<128x3xi32> to vector<128x1xi32>
    %14 = vector.broadcast %13 : vector<128x1xi32> to vector<128x65xi32>
    %15 = arith.cmpi eq, %14, %1 : vector<128x65xi32>
    %16 = arith.extui %15 : vector<128x65xi1> to vector<128x65xi32>
    %17 = arith.sitofp %16 : vector<128x65xi32> to vector<128x65xf32>
    %18 = arith.addf %12, %17 : vector<128x65xf32>
    %c0_1 = arith.constant 0 : index
    %c0_2 = arith.constant 0 : index
    %19 = vector.load %arg3[%c0_1, %c0_2] : memref<65x128xf32, #tpu.memory_space<vmem>>, vector<65x128xf32>
    %cst = arith.constant dense<0.000000e+00> : vector<128x128xf32>
    %20 = tpu.matmul %18, %19, %cst {dimension_numbers = #tpu.dot_dimension_numbers<[1], [0], [0], [1], [0, 0, 1, 1], [], []>} : vector<128x65xf32>, vector<65x128xf32>, vector<128x128xf32> -> vector<128x128xf32>
    %c0_3 = arith.constant 0 : index
    %c0_4 = arith.constant 0 : index
    %21 = vector.load %arg2[%c0_3, %c0_4] : memref<128x32xf32, #tpu.memory_space<vmem>>, vector<128x32xf32>
    %c0_5 = arith.constant 0 : index
    %c0_6 = arith.constant 0 : index
    %22 = vector.load %arg4[%c0_5, %c0_6] : memref<32x128xf32, #tpu.memory_space<vmem>>, vector<32x128xf32>
    %cst_7 = arith.constant dense<0.000000e+00> : vector<128x128xf32>
    %23 = tpu.matmul %21, %22, %cst_7 {dimension_numbers = #tpu.dot_dimension_numbers<[1], [0], [0], [1], [0, 0, 1, 1], [], []>} : vector<128x32xf32>, vector<32x128xf32>, vector<128x128xf32> -> vector<128x128xf32>
    %24 = arith.addf %20, %23 : vector<128x128xf32>
    %c0_8 = arith.constant 0 : index
    %c0_9 = arith.constant 0 : index
    %25 = vector.load %arg5[%c0_8, %c0_9] : memref<1x128xf32, #tpu.memory_space<vmem>>, vector<1x128xf32>
    %26 = vector.broadcast %25 : vector<1x128xf32> to vector<128x128xf32>
    %27 = arith.addf %24, %26 : vector<128x128xf32>
    %cst_10 = arith.constant 0.000000e+00 : f32
    %28 = vector.broadcast %cst_10 : f32 to vector<128x128xf32>
    %29 = arith.maximumf %27, %28 : vector<128x128xf32>
    %c0_11 = arith.constant 0 : index
    %c0_12 = arith.constant 0 : index
    %30 = vector.load %arg6[%c0_11, %c0_12] : memref<128x32xf32, #tpu.memory_space<vmem>>, vector<128x32xf32>
    %cst_13 = arith.constant dense<0.000000e+00> : vector<128x32xf32>
    %31 = tpu.matmul %29, %30, %cst_13 {dimension_numbers = #tpu.dot_dimension_numbers<[1], [0], [0], [1], [0, 0, 1, 1], [], []>} : vector<128x128xf32>, vector<128x32xf32>, vector<128x32xf32> -> vector<128x32xf32>
    %c0_14 = arith.constant 0 : index
    %c0_15 = arith.constant 0 : index
    %32 = vector.load %arg7[%c0_14, %c0_15] : memref<1x32xf32, #tpu.memory_space<vmem>>, vector<1x32xf32>
    %33 = vector.broadcast %32 : vector<1x32xf32> to vector<128x32xf32>
    %34 = arith.addf %31, %33 : vector<128x32xf32>
    %cst_16 = arith.constant 0.000000e+00 : f32
    %35 = vector.broadcast %cst_16 : f32 to vector<128x32xf32>
    %36 = arith.maximumf %34, %35 : vector<128x32xf32>
    %c0_17 = arith.constant 0 : index
    %c0_18 = arith.constant 0 : index
    %37 = vector.load %arg8[%c0_17, %c0_18] : memref<1x32xf32, #tpu.memory_space<vmem>>, vector<1x32xf32>
    %cst_19 = arith.constant dense<0.000000e+00> : vector<1x128xf32>
    %38 = tpu.matmul %37, %36, %cst_19 {dimension_numbers = #tpu.dot_dimension_numbers<[1], [1], [0], [0], [0, 0, 1, 0], [], []>} : vector<1x32xf32>, vector<128x32xf32>, vector<1x128xf32> -> vector<1x128xf32>
    %c0_20 = arith.constant 0 : index
    %c0_21 = arith.constant 0 : index
    %39 = vector.load %arg9[%c0_20, %c0_21] : memref<1x1xf32, #tpu.memory_space<vmem>>, vector<1x1xf32>
    %40 = vector.broadcast %39 : vector<1x1xf32> to vector<1x128xf32>
    %41 = arith.addf %38, %40 : vector<1x128xf32>
    %c0_22 = arith.constant 0 : index
    %c0_23 = arith.constant 0 : index
    %42 = vector.load %arg10[%c0_22, %c0_23] : memref<1x128xf32, #tpu.memory_space<vmem>>, vector<1x128xf32>
    tpu.vector_store %arg10[%c0_22, %c0_23], %41 {strides = array<i32>} : memref<1x128xf32, #tpu.memory_space<vmem>>, vector<1x128xf32>,
    return
  }
  func.func @transform_0(%arg0: i32) -> (i32, i32) {
    %c0_i32 = arith.constant 0 : i32
    %c0_i32_0 = arith.constant 0 : i32
    return %arg0, %c0_i32 : i32, i32
  }
  func.func @transform_1(%arg0: i32) -> (i32, i32) {
    %c0_i32 = arith.constant 0 : i32
    %c0_i32_0 = arith.constant 0 : i32
    return %arg0, %c0_i32 : i32, i32
  }
  func.func @transform_2(%arg0: i32) -> (i32, i32) {
    %c0_i32 = arith.constant 0 : i32
    %c0_i32_0 = arith.constant 0 : i32
    %c0_i32_1 = arith.constant 0 : i32
    return %c0_i32, %c0_i32_0 : i32, i32
  }
  func.func @transform_3(%arg0: i32) -> (i32, i32) {
    %c0_i32 = arith.constant 0 : i32
    %c0_i32_0 = arith.constant 0 : i32
    %c0_i32_1 = arith.constant 0 : i32
    return %c0_i32, %c0_i32_0 : i32, i32
  }
  func.func @transform_4(%arg0: i32) -> (i32, i32) {
    %c0_i32 = arith.constant 0 : i32
    %c0_i32_0 = arith.constant 0 : i32
    %c0_i32_1 = arith.constant 0 : i32
    return %c0_i32, %c0_i32_0 : i32, i32
  }
  func.func @transform_5(%arg0: i32) -> (i32, i32) {
    %c0_i32 = arith.constant 0 : i32
    %c0_i32_0 = arith.constant 0 : i32
    %c0_i32_1 = arith.constant 0 : i32
    return %c0_i32, %c0_i32_0 : i32, i32
  }
  func.func @transform_6(%arg0: i32) -> (i32, i32) {
    %c0_i32 = arith.constant 0 : i32
    %c0_i32_0 = arith.constant 0 : i32
    %c0_i32_1 = arith.constant 0 : i32
    return %c0_i32, %c0_i32_0 : i32, i32
  }
  func.func @transform_7(%arg0: i32) -> (i32, i32) {
    %c0_i32 = arith.constant 0 : i32
    %c0_i32_0 = arith.constant 0 : i32
    %c0_i32_1 = arith.constant 0 : i32
    return %c0_i32, %c0_i32_0 : i32, i32
  }
  func.func @transform_8(%arg0: i32) -> (i32, i32) {
    %c0_i32 = arith.constant 0 : i32
    %c0_i32_0 = arith.constant 0 : i32
    %c0_i32_1 = arith.constant 0 : i32
    return %c0_i32, %c0_i32_0 : i32, i32
  }
  func.func @transform_9(%arg0: i32) -> (i32, i32) {
    %c0_i32 = arith.constant 0 : i32
    %c0_i32_0 = arith.constant 0 : i32
    return %c0_i32, %arg0 : i32, i32
  }
}

</mosaic_0001>

<llo_original>
// kernel: tpu_custom_call.1
$region0: #{tpu_custom_call.1}
  #allocation0 [shape = 'u32[]', space=smem, size = 0x4, offset = 0x4, fixed_abs, tag = 'smem constant byte address 0x4 - core index']
  #allocation1 [shape = 'u32[144,128]{1,0:T(1,128)}', space=vmem, size = 0x12000, scoped, tag = 'internal scratch']
  #allocation2 [shape = 'f32[1,1]{1,0:T(1,128)S(1)}', space=vmem, size = 0x200, scoped, tag = 'scoped memory for tpu_custom_call.1']
  %s0 = inlined_call_operand.vmem [shape: s32[128,3], index: 0, kind: input, shape index: {}]
  %s1 = inlined_call_operand.vmem [shape: f32[128,32], index: 1, kind: input, shape index: {}]
  %s2 = inlined_call_operand.vmem [shape: f32[65,128], index: 2, kind: input, shape index: {}]
  %s3 = inlined_call_operand.vmem [shape: f32[32,128], index: 3, kind: input, shape index: {}]
  %s4 = inlined_call_operand.vmem [shape: f32[1,128], index: 4, kind: input, shape index: {}]
  %s5 = inlined_call_operand.vmem [shape: f32[128,32], index: 5, kind: input, shape index: {}]
  %s6 = inlined_call_operand.vmem [shape: f32[1,32], index: 6, kind: input, shape index: {}]
  %s7 = inlined_call_operand.vmem [shape: f32[1,32], index: 7, kind: input, shape index: {}]
  %s8 = inlined_call_operand.<no memory space> [shape: f32[1,1], index: 8, kind: input, shape index: {}]
  %s9 = inlined_call_operand.hbm [shape: f32[1,128], index: 9, kind: output, shape index: {}]
  %s10 = sld [smem:[#allocation0]]
  $region46: #{tpu_custom_call.1} parent=0
    _
  %s12 = ssub.s32 1, %s10
  %s13 = scalar_select 0, %s12, %s10
  %v14 = vstv %s8
  %15 = vst [vmem:[#allocation2] sm:$0x1] %v14
  $region1: #{tpu_custom_call.1} parent=0
    #allocation3 [shape = 'u8[512]{0}', space=vmem, size = 0x400, scoped, tag = 'output window, operand 0, single buffered']
    #allocation4 [shape = 's32[1]{0}', space=sflag, size = 0x4, scoped, tag = 'scoped memory for tpu_custom_call.1']
    %16 = vsyncpa [#allocation4], 0
    // Predicated region
    $region2: #{tpu_custom_call.1} parent=1 // pred_check
      _
    $region3: #{tpu_custom_call.1} parent=1 // pred_check_branch
      %18 = sbr.rel (0) target = $region5
    $region4: #{tpu_custom_call.1} parent=1 // pred_region
      _
    $region5: #{tpu_custom_call.1} parent=1 // pred_fallthru
      _
    // Predicated region
    $region6: #{tpu_custom_call.1} parent=1 // pred_check
      _
    $region7: #{tpu_custom_call.1} parent=1 // pred_check_branch
      %20 = sbr.rel (0) target = $region9
    $region8: #{tpu_custom_call.1} parent=1 // pred_region
      _
    $region9: #{tpu_custom_call.1} parent=1 // pred_fallthru
      _
    // Predicated region
    $region10: #{tpu_custom_call.1} parent=1 // pred_check
      _
    $region11: #{tpu_custom_call.1} parent=1 // pred_check_branch
      %22 = sbr.rel (0) target = $region13
    $region12: #{tpu_custom_call.1} parent=1 // pred_region
      _
    $region13: #{tpu_custom_call.1} parent=1 // pred_fallthru
      _
    // Predicated region
    $region14: #{tpu_custom_call.1} parent=1 // pred_check
      _
    $region15: #{tpu_custom_call.1} parent=1 // pred_check_branch
      %24 = sbr.rel (0) target = $region17
    $region16: #{tpu_custom_call.1} parent=1 // pred_region
      _
    $region17: #{tpu_custom_call.1} parent=1 // pred_fallthru
      _
    // Predicated region
    $region18: #{tpu_custom_call.1} parent=1 // pred_check
      _
    $region19: #{tpu_custom_call.1} parent=1 // pred_check_branch
      %26 = sbr.rel (0) target = $region21
    $region20: #{tpu_custom_call.1} parent=1 // pred_region
      _
    $region21: #{tpu_custom_call.1} parent=1 // pred_fallthru
      _
    // Predicated region
    $region22: #{tpu_custom_call.1} parent=1 // pred_check
      _
    $region23: #{tpu_custom_call.1} parent=1 // pred_check_branch
      %28 = sbr.rel (0) target = $region25
    $region24: #{tpu_custom_call.1} parent=1 // pred_region
      _
    $region25: #{tpu_custom_call.1} parent=1 // pred_fallthru
      _
    // Predicated region
    $region26: #{tpu_custom_call.1} parent=1 // pred_check
      _
    $region27: #{tpu_custom_call.1} parent=1 // pred_check_branch
      %30 = sbr.rel (0) target = $region29
    $region28: #{tpu_custom_call.1} parent=1 // pred_region
      _
    $region29: #{tpu_custom_call.1} parent=1 // pred_fallthru
      _
    // Predicated region
    $region30: #{tpu_custom_call.1} parent=1 // pred_check
      _
    $region31: #{tpu_custom_call.1} parent=1 // pred_check_branch
      %32 = sbr.rel (0) target = $region33
    $region32: #{tpu_custom_call.1} parent=1 // pred_region
      _
    $region33: #{tpu_custom_call.1} parent=1 // pred_fallthru
      _
    // Predicated region
    $region34: #{tpu_custom_call.1} parent=1 // pred_check
      _
    $region35: #{tpu_custom_call.1} parent=1 // pred_check_branch
      %34 = sbr.rel (0) target = $region37
    $region36: #{tpu_custom_call.1} parent=1 // pred_region
      _
    $region37: #{tpu_custom_call.1} parent=1 // pred_fallthru
      _
    %v35 = vld [vmem:[%s0] sm:$0xff]
    %v36 = vld [vmem:[%s0 + $0x8] sm:$0xff]
    %v37 = vld [vmem:[%s0 + $0x10] sm:$0xff]
    %v38 = vld [vmem:[%s0 + $0x18] sm:$0xff]
    %v39 = vld [vmem:[%s0 + $0x20] sm:$0xff]
    %v40 = vld [vmem:[%s0 + $0x28] sm:$0xff]
    %v41 = vld [vmem:[%s0 + $0x30] sm:$0xff]
    %v42 = vld [vmem:[%s0 + $0x38] sm:$0xff]
    %v43 = vld [vmem:[%s0 + $0x40] sm:$0xff]
    %v44 = vld [vmem:[%s0 + $0x48] sm:$0xff]
    %v45 = vld [vmem:[%s0 + $0x50] sm:$0xff]
    %v46 = vld [vmem:[%s0 + $0x58] sm:$0xff]
    %v47 = vld [vmem:[%s0 + $0x60] sm:$0xff]
    %v48 = vld [vmem:[%s0 + $0x68] sm:$0xff]
    %v49 = vld [vmem:[%s0 + $0x70] sm:$0xff]
    %v50 = vld [vmem:[%s0 + $0x78] sm:$0xff]
    %v51 = vlaneseq
    %v52 = vand.u32 %v51, 127
    %53 = vset.pattern.permute.xlu0 0
    %54 = vperm.xlu0 %53, %v35
    %v55 = vpop.permute.xlu0 %54
    %56 = vset.pattern.permute.xlu0 0
    %57 = vperm.xlu0 %56, %v36
    %v58 = vpop.permute.xlu0 %57
    %59 = vset.pattern.permute.xlu0 0
    %60 = vperm.xlu0 %59, %v37
    %v61 = vpop.permute.xlu0 %60
    %62 = vset.pattern.permute.xlu0 0
    %63 = vperm.xlu0 %62, %v38
    %v64 = vpop.permute.xlu0 %63
    %65 = vset.pattern.permute.xlu0 0
    %66 = vperm.xlu0 %65, %v39
    %v67 = vpop.permute.xlu0 %66
    %68 = vset.pattern.permute.xlu0 0
    %69 = vperm.xlu0 %68, %v40
    %v70 = vpop.permute.xlu0 %69
    %71 = vset.pattern.permute.xlu0 0
    %72 = vperm.xlu0 %71, %v41
    %v73 = vpop.permute.xlu0 %72
    %74 = vset.pattern.permute.xlu0 0
    %75 = vperm.xlu0 %74, %v42
    %v76 = vpop.permute.xlu0 %75
    %77 = vset.pattern.permute.xlu0 0
    %78 = vperm.xlu0 %77, %v43
    %v79 = vpop.permute.xlu0 %78
    %80 = vset.pattern.permute.xlu0 0
    %81 = vperm.xlu0 %80, %v44
    %v82 = vpop.permute.xlu0 %81
    %83 = vset.pattern.permute.xlu0 0
    %84 = vperm.xlu0 %83, %v45
    %v85 = vpop.permute.xlu0 %84
    %86 = vset.pattern.permute.xlu0 0
    %87 = vperm.xlu0 %86, %v46
    %v88 = vpop.permute.xlu0 %87
    %89 = vset.pattern.permute.xlu0 0
    %90 = vperm.xlu0 %89, %v47
    %v91 = vpop.permute.xlu0 %90
    %92 = vset.pattern.permute.xlu0 0
    %93 = vperm.xlu0 %92, %v48
    %v94 = vpop.permute.xlu0 %93
    %95 = vset.pattern.permute.xlu0 0
    %96 = vperm.xlu0 %95, %v49
    %v97 = vpop.permute.xlu0 %96
    %98 = vset.pattern.permute.xlu0 0
    %99 = vperm.xlu0 %98, %v50
    %v100 = vpop.permute.xlu0 %99
    %vm101 = vcmp.eq.s32.totalorder %v55, %v52
    %vm102 = vcmp.eq.s32.totalorder %v58, %v52
    %vm103 = vcmp.eq.s32.totalorder %v61, %v52
    %vm104 = vcmp.eq.s32.totalorder %v64, %v52
    %vm105 = vcmp.eq.s32.totalorder %v67, %v52
    %vm106 = vcmp.eq.s32.totalorder %v70, %v52
    %vm107 = vcmp.eq.s32.totalorder %v73, %v52
    %vm108 = vcmp.eq.s32.totalorder %v76, %v52
    %vm109 = vcmp.eq.s32.totalorder %v79, %v52
    %vm110 = vcmp.eq.s32.totalorder %v82, %v52
    %vm111 = vcmp.eq.s32.totalorder %v85, %v52
    %vm112 = vcmp.eq.s32.totalorder %v88, %v52
    %vm113 = vcmp.eq.s32.totalorder %v91, %v52
    %vm114 = vcmp.eq.s32.totalorder %v94, %v52
    %vm115 = vcmp.eq.s32.totalorder %v97, %v52
    %vm116 = vcmp.eq.s32.totalorder %v100, %v52
    %v117 = vsel %vm101, 1, 0
    %v118 = vsel %vm102, 1, 0
    %v119 = vsel %vm103, 1, 0
    %v120 = vsel %vm104, 1, 0
    %v121 = vsel %vm105, 1, 0
    %v122 = vsel %vm106, 1, 0
    %v123 = vsel %vm107, 1, 0
    %v124 = vsel %vm108, 1, 0
    %v125 = vsel %vm109, 1, 0
    %v126 = vsel %vm110, 1, 0
    %v127 = vsel %vm111, 1, 0
    %v128 = vsel %vm112, 1, 0
    %v129 = vsel %vm113, 1, 0
    %v130 = vsel %vm114, 1, 0
    %v131 = vsel %vm115, 1, 0
    %v132 = vsel %vm116, 1, 0
    %v133 = vcvt.s32.f32 %v117
    %v134 = vcvt.s32.f32 %v118
    %v135 = vcvt.s32.f32 %v119
    %v136 = vcvt.s32.f32 %v120
    %v137 = vcvt.s32.f32 %v121
    %v138 = vcvt.s32.f32 %v122
    %v139 = vcvt.s32.f32 %v123
    %v140 = vcvt.s32.f32 %v124
    %v141 = vcvt.s32.f32 %v125
    %v142 = vcvt.s32.f32 %v126
    %v143 = vcvt.s32.f32 %v127
    %v144 = vcvt.s32.f32 %v128
    %v145 = vcvt.s32.f32 %v129
    %v146 = vcvt.s32.f32 %v130
    %v147 = vcvt.s32.f32 %v131
    %v148 = vcvt.s32.f32 %v132
    %149 = vset.pattern.permute.xlu0 1
    %150 = vperm.xlu0 %149, %v35
    %v151 = vpop.permute.xlu0 %150
    %152 = vset.pattern.permute.xlu0 1
    %153 = vperm.xlu0 %152, %v36
    %v154 = vpop.permute.xlu0 %153
    %155 = vset.pattern.permute.xlu0 1
    %156 = vperm.xlu0 %155, %v37
    %v157 = vpop.permute.xlu0 %156
    %158 = vset.pattern.permute.xlu0 1
    %159 = vperm.xlu0 %158, %v38
    %v160 = vpop.permute.xlu0 %159
    %161 = vset.pattern.permute.xlu0 1
    %162 = vperm.xlu0 %161, %v39
    %v163 = vpop.permute.xlu0 %162
    %164 = vset.pattern.permute.xlu0 1
    %165 = vperm.xlu0 %164, %v40
    %v166 = vpop.permute.xlu0 %165
    %167 = vset.pattern.permute.xlu0 1
    %168 = vperm.xlu0 %167, %v41
    %v169 = vpop.permute.xlu0 %168
    %170 = vset.pattern.permute.xlu0 1
    %171 = vperm.xlu0 %170, %v42
    %v172 = vpop.permute.xlu0 %171
    %173 = vset.pattern.permute.xlu0 1
    %174 = vperm.xlu0 %173, %v43
    %v175 = vpop.permute.xlu0 %174
    %176 = vset.pattern.permute.xlu0 1
    %177 = vperm.xlu0 %176, %v44
    %v178 = vpop.permute.xlu0 %177
    %179 = vset.pattern.permute.xlu0 1
    %180 = vperm.xlu0 %179, %v45
    %v181 = vpop.permute.xlu0 %180
    %182 = vset.pattern.permute.xlu0 1
    %183 = vperm.xlu0 %182, %v46
    %v184 = vpop.permute.xlu0 %183
    %185 = vset.pattern.permute.xlu0 1
    %186 = vperm.xlu0 %185, %v47
    %v187 = vpop.permute.xlu0 %186
    %188 = vset.pattern.permute.xlu0 1
    %189 = vperm.xlu0 %188, %v48
    %v190 = vpop.permute.xlu0 %189
    %191 = vset.pattern.permute.xlu0 1
    %192 = vperm.xlu0 %191, %v49
    %v193 = vpop.permute.xlu0 %192
    %194 = vset.pattern.permute.xlu0 1
    %195 = vperm.xlu0 %194, %v50
    %v196 = vpop.permute.xlu0 %195
    %vm197 = vcmp.eq.s32.totalorder %v151, %v52
    %vm198 = vcmp.eq.s32.totalorder %v154, %v52
    %vm199 = vcmp.eq.s32.totalorder %v157, %v52
    %vm200 = vcmp.eq.s32.totalorder %v160, %v52
    %vm201 = vcmp.eq.s32.totalorder %v163, %v52
    %vm202 = vcmp.eq.s32.totalorder %v166, %v52
    %vm203 = vcmp.eq.s32.totalorder %v169, %v52
    %vm204 = vcmp.eq.s32.totalorder %v172, %v52
    %vm205 = vcmp.eq.s32.totalorder %v175, %v52
    %vm206 = vcmp.eq.s32.totalorder %v178, %v52
    %vm207 = vcmp.eq.s32.totalorder %v181, %v52
    %vm208 = vcmp.eq.s32.totalorder %v184, %v52
    %vm209 = vcmp.eq.s32.totalorder %v187, %v52
    %vm210 = vcmp.eq.s32.totalorder %v190, %v52
    %vm211 = vcmp.eq.s32.totalorder %v193, %v52
    %vm212 = vcmp.eq.s32.totalorder %v196, %v52
    %v213 = vsel %vm197, 1, 0
    %v214 = vsel %vm198, 1, 0
    %v215 = vsel %vm199, 1, 0
    %v216 = vsel %vm200, 1, 0
    %v217 = vsel %vm201, 1, 0
    %v218 = vsel %vm202, 1, 0
    %v219 = vsel %vm203, 1, 0
    %v220 = vsel %vm204, 1, 0
    %v221 = vsel %vm205, 1, 0
    %v222 = vsel %vm206, 1, 0
    %v223 = vsel %vm207, 1, 0
    %v224 = vsel %vm208, 1, 0
    %v225 = vsel %vm209, 1, 0
    %v226 = vsel %vm210, 1, 0
    %v227 = vsel %vm211, 1, 0
    %v228 = vsel %vm212, 1, 0
    %v229 = vcvt.s32.f32 %v213
    %v230 = vcvt.s32.f32 %v214
    %v231 = vcvt.s32.f32 %v215
    %v232 = vcvt.s32.f32 %v216
    %v233 = vcvt.s32.f32 %v217
    %v234 = vcvt.s32.f32 %v218
    %v235 = vcvt.s32.f32 %v219
    %v236 = vcvt.s32.f32 %v220
    %v237 = vcvt.s32.f32 %v221
    %v238 = vcvt.s32.f32 %v222
    %v239 = vcvt.s32.f32 %v223
    %v240 = vcvt.s32.f32 %v224
    %v241 = vcvt.s32.f32 %v225
    %v242 = vcvt.s32.f32 %v226
    %v243 = vcvt.s32.f32 %v227
    %v244 = vcvt.s32.f32 %v228
    %v245 = vadd.f32 %v133, %v229
    %v246 = vadd.f32 %v134, %v230
    %v247 = vadd.f32 %v135, %v231
    %v248 = vadd.f32 %v136, %v232
    %v249 = vadd.f32 %v137, %v233
    %v250 = vadd.f32 %v138, %v234
    %v251 = vadd.f32 %v139, %v235
    %v252 = vadd.f32 %v140, %v236
    %v253 = vadd.f32 %v141, %v237
    %v254 = vadd.f32 %v142, %v238
    %v255 = vadd.f32 %v143, %v239
    %v256 = vadd.f32 %v144, %v240
    %v257 = vadd.f32 %v145, %v241
    %v258 = vadd.f32 %v146, %v242
    %v259 = vadd.f32 %v147, %v243
    %v260 = vadd.f32 %v148, %v244
    %261 = vset.pattern.permute.xlu0 2
    %262 = vperm.xlu0 %261, %v35
    %v263 = vpop.permute.xlu0 %262
    %264 = vset.pattern.permute.xlu0 2
    %265 = vperm.xlu0 %264, %v36
    %v266 = vpop.permute.xlu0 %265
    %267 = vset.pattern.permute.xlu0 2
    %268 = vperm.xlu0 %267, %v37
    %v269 = vpop.permute.xlu0 %268
    %270 = vset.pattern.permute.xlu0 2
    %271 = vperm.xlu0 %270, %v38
    %v272 = vpop.permute.xlu0 %271
    %273 = vset.pattern.permute.xlu0 2
    %274 = vperm.xlu0 %273, %v39
    %v275 = vpop.permute.xlu0 %274
    %276 = vset.pattern.permute.xlu0 2
    %277 = vperm.xlu0 %276, %v40
    %v278 = vpop.permute.xlu0 %277
    %279 = vset.pattern.permute.xlu0 2
    %280 = vperm.xlu0 %279, %v41
    %v281 = vpop.permute.xlu0 %280
    %282 = vset.pattern.permute.xlu0 2
    %283 = vperm.xlu0 %282, %v42
    %v284 = vpop.permute.xlu0 %283
    %285 = vset.pattern.permute.xlu0 2
    %286 = vperm.xlu0 %285, %v43
    %v287 = vpop.permute.xlu0 %286
    %288 = vset.pattern.permute.xlu0 2
    %289 = vperm.xlu0 %288, %v44
    %v290 = vpop.permute.xlu0 %289
    %291 = vset.pattern.permute.xlu0 2
    %292 = vperm.xlu0 %291, %v45
    %v293 = vpop.permute.xlu0 %292
    %294 = vset.pattern.permute.xlu0 2
    %295 = vperm.xlu0 %294, %v46
    %v296 = vpop.permute.xlu0 %295
    %297 = vset.pattern.permute.xlu0 2
    %298 = vperm.xlu0 %297, %v47
    %v299 = vpop.permute.xlu0 %298
    %300 = vset.pattern.permute.xlu0 2
    %301 = vperm.xlu0 %300, %v48
    %v302 = vpop.permute.xlu0 %301
    %303 = vset.pattern.permute.xlu0 2
    %304 = vperm.xlu0 %303, %v49
    %v305 = vpop.permute.xlu0 %304
    %306 = vset.pattern.permute.xlu0 2
    %307 = vperm.xlu0 %306, %v50
    %v308 = vpop.permute.xlu0 %307
    %vm309 = vcmp.eq.s32.totalorder %v263, %v52
    %vm310 = vcmp.eq.s32.totalorder %v266, %v52
    %vm311 = vcmp.eq.s32.totalorder %v269, %v52
    %vm312 = vcmp.eq.s32.totalorder %v272, %v52
    %vm313 = vcmp.eq.s32.totalorder %v275, %v52
    %vm314 = vcmp.eq.s32.totalorder %v278, %v52
    %vm315 = vcmp.eq.s32.totalorder %v281, %v52
    %vm316 = vcmp.eq.s32.totalorder %v284, %v52
    %vm317 = vcmp.eq.s32.totalorder %v287, %v52
    %vm318 = vcmp.eq.s32.totalorder %v290, %v52
    %vm319 = vcmp.eq.s32.totalorder %v293, %v52
    %vm320 = vcmp.eq.s32.totalorder %v296, %v52
    %vm321 = vcmp.eq.s32.totalorder %v299, %v52
    %vm322 = vcmp.eq.s32.totalorder %v302, %v52
    %vm323 = vcmp.eq.s32.totalorder %v305, %v52
    %vm324 = vcmp.eq.s32.totalorder %v308, %v52
    %v325 = vsel %vm309, 1, 0
    %v326 = vsel %vm310, 1, 0
    %v327 = vsel %vm311, 1, 0
    %v328 = vsel %vm312, 1, 0
    %v329 = vsel %vm313, 1, 0
    %v330 = vsel %vm314, 1, 0
    %v331 = vsel %vm315, 1, 0
    %v332 = vsel %vm316, 1, 0
    %v333 = vsel %vm317, 1, 0
    %v334 = vsel %vm318, 1, 0
    %v335 = vsel %vm319, 1, 0
    %v336 = vsel %vm320, 1, 0
    %v337 = vsel %vm321, 1, 0
    %v338 = vsel %vm322, 1, 0
    %v339 = vsel %vm323, 1, 0
    %v340 = vsel %vm324, 1, 0
    %v341 = vcvt.s32.f32 %v325
    %v342 = vcvt.s32.f32 %v326
    %v343 = vcvt.s32.f32 %v327
    %v344 = vcvt.s32.f32 %v328
    %v345 = vcvt.s32.f32 %v329
    %v346 = vcvt.s32.f32 %v330
    %v347 = vcvt.s32.f32 %v331
    %v348 = vcvt.s32.f32 %v332
    %v349 = vcvt.s32.f32 %v333
    %v350 = vcvt.s32.f32 %v334
    %v351 = vcvt.s32.f32 %v335
    %v352 = vcvt.s32.f32 %v336
    %v353 = vcvt.s32.f32 %v337
    %v354 = vcvt.s32.f32 %v338
    %v355 = vcvt.s32.f32 %v339
    %v356 = vcvt.s32.f32 %v340
    %v357 = vadd.f32 %v245, %v341
    %v358 = vadd.f32 %v246, %v342
    %v359 = vadd.f32 %v247, %v343
    %v360 = vadd.f32 %v248, %v344
    %v361 = vadd.f32 %v249, %v345
    %v362 = vadd.f32 %v250, %v346
    %v363 = vadd.f32 %v251, %v347
    %v364 = vadd.f32 %v252, %v348
    %v365 = vadd.f32 %v253, %v349
    %v366 = vadd.f32 %v254, %v350
    %v367 = vadd.f32 %v255, %v351
    %v368 = vadd.f32 %v256, %v352
    %v369 = vadd.f32 %v257, %v353
    %v370 = vadd.f32 %v258, %v354
    %v371 = vadd.f32 %v259, %v355
    %v372 = vadd.f32 %v260, %v356
    %v373 = vld [vmem:[%s2] sm:$0xff]
    %v374 = vld [vmem:[%s2 + $0x8] sm:$0xff]
    %v375 = vld [vmem:[%s2 + $0x10] sm:$0xff]
    %v376 = vld [vmem:[%s2 + $0x18] sm:$0xff]
    %v377 = vld [vmem:[%s2 + $0x20] sm:$0xff]
    %v378 = vld [vmem:[%s2 + $0x28] sm:$0xff]
    %v379 = vld [vmem:[%s2 + $0x30] sm:$0xff]
    %v380 = vld [vmem:[%s2 + $0x38] sm:$0xff]
    %v381 = vld [vmem:[%s2 + $0x40] sm:$0x1]
    %v382 = vld [vmem:[%s1] sm:$0xff]
    %v383 = vld [vmem:[%s1 + $0x8] sm:$0xff]
    %v384 = vld [vmem:[%s1 + $0x10] sm:$0xff]
    %v385 = vld [vmem:[%s1 + $0x18] sm:$0xff]
    %v386 = vld [vmem:[%s1 + $0x20] sm:$0xff]
    %v387 = vld [vmem:[%s1 + $0x28] sm:$0xff]
    %v388 = vld [vmem:[%s1 + $0x30] sm:$0xff]
    %v389 = vld [vmem:[%s1 + $0x38] sm:$0xff]
    %v390 = vld [vmem:[%s1 + $0x40] sm:$0xff]
    %v391 = vld [vmem:[%s1 + $0x48] sm:$0xff]
    %v392 = vld [vmem:[%s1 + $0x50] sm:$0xff]
    %v393 = vld [vmem:[%s1 + $0x58] sm:$0xff]
    %v394 = vld [vmem:[%s1 + $0x60] sm:$0xff]
    %v395 = vld [vmem:[%s1 + $0x68] sm:$0xff]
    %v396 = vld [vmem:[%s1 + $0x70] sm:$0xff]
    %v397 = vld [vmem:[%s1 + $0x78] sm:$0xff]
    %v398 = vld [vmem:[%s3] sm:$0xff]
    %v399 = vld [vmem:[%s3 + $0x8] sm:$0xff]
    %v400 = vld [vmem:[%s3 + $0x10] sm:$0xff]
    %v401 = vld [vmem:[%s3 + $0x18] sm:$0xff]
    %vm402 = vcmask 261120
    %v404 = vsel %vm402, %v382, 0
    %v407 = vsel %vm402, %v383, 0
    %v410 = vsel %vm402, %v384, 0
    %v413 = vsel %vm402, %v385, 0
    %v416 = vsel %vm402, %v386, 0
    %v419 = vsel %vm402, %v387, 0
    %v422 = vsel %vm402, %v388, 0
    %v425 = vsel %vm402, %v389, 0
    %v428 = vsel %vm402, %v390, 0
    %v431 = vsel %vm402, %v391, 0
    %v434 = vsel %vm402, %v392, 0
    %v437 = vsel %vm402, %v393, 0
    %v440 = vsel %vm402, %v394, 0
    %v443 = vsel %vm402, %v395, 0
    %v446 = vsel %vm402, %v396, 0
    %v449 = vsel %vm402, %v397, 0
    %451 = vmatprep.subr.mxu0 0.0
    %452 = vmatpush1.msra.mxu0 0.0
    %453 = vmatprep.subr.mxu0 0.0
    %454 = vmatpush1.msra.mxu0 0.0
    %455 = vmatprep.subr.mxu0 0.0
    %456 = vmatpush1.msra.mxu0 0.0
    %457 = vmatprep.subr.mxu0 0.0
    %458 = vmatpush1.msra.mxu0 0.0
    %459 = vmatprep.subr.mxu0 0.0
    %460 = vmatpush1.msra.mxu0 0.0
    %461 = vmatprep.subr.mxu0 0.0
    %462 = vmatpush1.msra.mxu0 0.0
    %463 = vmatprep.subr.mxu0 0.0
    %464 = vmatpush1.msra.mxu0 0.0
    %465 = vmatprep.subr.mxu0 0.0
    %466 = vmatpush1.msra.mxu0 0.0
    %467 = vmatprep.subr.mxu0 0.0
    %468 = vmatpush1.msra.mxu0 0.0
    %469 = vmatprep.subr.mxu0 0.0
    %470 = vmatpush1.msra.mxu0 0.0
    %471 = vmatprep.subr.mxu0 0.0
    %472 = vmatpush1.msra.mxu0 0.0
    %473 = vmatprep.subr.mxu0 0.0
    %474 = vmatpush1.msra.mxu0 0.0
    %475 = vmatprep.subr.mxu0 0.0
    %476 = vmatpush1.msra.mxu0 %v401
    %477 = vmatprep.subr.mxu0 0.0
    %478 = vmatpush1.msra.mxu0 %v400
    %479 = vmatprep.subr.mxu0 0.0
    %480 = vmatpush1.msra.mxu0 %v399
    %481 = vmatprep.subr.mxu0 0.0
    %482 = vmatpush1.msra.mxu0 %v398
    %483 = vmatprep.subr.mxu0 0.0
    %484 = vmatpush2.msra.mxu0 0.0
    %485 = vmatprep.subr.mxu0 0.0
    %486 = vmatpush2.msra.mxu0 0.0
    %487 = vmatprep.subr.mxu0 0.0
    %488 = vmatpush2.msra.mxu0 0.0
    %489 = vmatprep.subr.mxu0 0.0
    %490 = vmatpush2.msra.mxu0 0.0
    %491 = vmatprep.subr.mxu0 0.0
    %492 = vmatpush2.msra.mxu0 0.0
    %493 = vmatprep.subr.mxu0 0.0
    %494 = vmatpush2.msra.mxu0 0.0
    %495 = vmatprep.subr.mxu0 0.0
    %496 = vmatpush2.msra.mxu0 0.0
    %497 = vmatprep.subr.mxu0 0.0
    %498 = vmatpush2.msra.mxu0 0.0
    %499 = vmatprep.subr.mxu0 0.0
    %500 = vmatpush2.msra.mxu0 0.0
    %501 = vmatprep.subr.mxu0 0.0
    %502 = vmatpush2.msra.mxu0 0.0
    %503 = vmatprep.subr.mxu0 0.0
    %504 = vmatpush2.msra.mxu0 0.0
    %505 = vmatprep.subr.mxu0 0.0
    %506 = vmatpush2.msra.mxu0 0.0
    %507 = vmatprep.subr.mxu0 0.0
    %508 = vmatpush2.msra.mxu0 0.0
    %509 = vmatprep.subr.mxu0 0.0
    %510 = vmatpush2.msra.mxu0 0.0
    %511 = vmatprep.subr.mxu0 0.0
    %512 = vmatpush2.msra.mxu0 0.0
    %513 = vmatprep.subr.mxu0 0.0
    %514 = vmatpush2.msra.mxu0 0.0
    %515 = vmatprep.mubr.f32.mxu0 0.0
    %516 = vmatmul.mubr.f32.gmra.mxu0 %v404
    %v517 = vpop.f32.mrf.mxu0
    %v518 = vadd.f32 0.0, %v517
    %v519 = vpop.f32.mrf.mxu0
    %520 = vmatprep.mubr.f32.mxu0 0.0
    %521 = vmatmul.mubr.f32.gmra.mxu0 %v407
    %v522 = vpop.f32.mrf.mxu0
    %v523 = vadd.f32 0.0, %v522
    %v524 = vpop.f32.mrf.mxu0
    %525 = vmatprep.mubr.f32.mxu0 0.0
    %526 = vmatmul.mubr.f32.gmra.mxu0 %v410
    %v527 = vpop.f32.mrf.mxu0
    %v528 = vadd.f32 0.0, %v527
    %v529 = vpop.f32.mrf.mxu0
    %530 = vmatprep.mubr.f32.mxu0 0.0
    %531 = vmatmul.mubr.f32.gmra.mxu0 %v413
    %v532 = vpop.f32.mrf.mxu0
    %v533 = vadd.f32 0.0, %v532
    %v534 = vpop.f32.mrf.mxu0
    %535 = vmatprep.mubr.f32.mxu0 0.0
    %536 = vmatmul.mubr.f32.gmra.mxu0 %v416
    %v537 = vpop.f32.mrf.mxu0
    %v538 = vadd.f32 0.0, %v537
    %v539 = vpop.f32.mrf.mxu0
    %540 = vmatprep.mubr.f32.mxu0 0.0
    %541 = vmatmul.mubr.f32.gmra.mxu0 %v419
    %v542 = vpop.f32.mrf.mxu0
    %v543 = vadd.f32 0.0, %v542
    %v544 = vpop.f32.mrf.mxu0
    %545 = vmatprep.mubr.f32.mxu0 0.0
    %546 = vmatmul.mubr.f32.gmra.mxu0 %v422
    %v547 = vpop.f32.mrf.mxu0
    %v548 = vadd.f32 0.0, %v547
    %v549 = vpop.f32.mrf.mxu0
    %550 = vmatprep.mubr.f32.mxu0 0.0
    %551 = vmatmul.mubr.f32.gmra.mxu0 %v425
    %v552 = vpop.f32.mrf.mxu0
    %v553 = vadd.f32 0.0, %v552
    %v554 = vpop.f32.mrf.mxu0
    %555 = vmatprep.mubr.f32.mxu0 0.0
    %556 = vmatmul.mubr.f32.gmra.mxu0 %v428
    %v557 = vpop.f32.mrf.mxu0
    %v558 = vadd.f32 0.0, %v557
    %v559 = vpop.f32.mrf.mxu0
    %560 = vmatprep.mubr.f32.mxu0 0.0
    %561 = vmatmul.mubr.f32.gmra.mxu0 %v431
    %v562 = vpop.f32.mrf.mxu0
    %v563 = vadd.f32 0.0, %v562
    %v564 = vpop.f32.mrf.mxu0
    %565 = vmatprep.mubr.f32.mxu0 0.0
    %566 = vmatmul.mubr.f32.gmra.mxu0 %v434
    %v567 = vpop.f32.mrf.mxu0
    %v568 = vadd.f32 0.0, %v567
    %v569 = vpop.f32.mrf.mxu0
    %570 = vmatprep.mubr.f32.mxu0 0.0
    %571 = vmatmul.mubr.f32.gmra.mxu0 %v437
    %v572 = vpop.f32.mrf.mxu0
    %v573 = vadd.f32 0.0, %v572
    %v574 = vpop.f32.mrf.mxu0
    %575 = vmatprep.mubr.f32.mxu0 0.0
    %576 = vmatmul.mubr.f32.gmra.mxu0 %v440
    %v577 = vpop.f32.mrf.mxu0
    %v578 = vadd.f32 0.0, %v577
    %v579 = vpop.f32.mrf.mxu0
    %580 = vmatprep.mubr.f32.mxu0 0.0
    %581 = vmatmul.mubr.f32.gmra.mxu0 %v443
    %v582 = vpop.f32.mrf.mxu0
    %v583 = vadd.f32 0.0, %v582
    %v584 = vpop.f32.mrf.mxu0
    %585 = vmatprep.mubr.f32.mxu0 0.0
    %586 = vmatmul.mubr.f32.gmra.mxu0 %v446
    %v587 = vpop.f32.mrf.mxu0
    %v588 = vadd.f32 0.0, %v587
    %v589 = vpop.f32.mrf.mxu0
    %590 = vmatprep.mubr.f32.mxu0 0.0
    %591 = vmatmul.mubr.f32.gmra.mxu0 %v449
    %v592 = vpop.f32.mrf.mxu0
    %v593 = vadd.f32 0.0, %v592
    %v594 = vpop.f32.mrf.mxu0
    %595 = vdwg.mxu0
    %vm596 = vcmask 531456
    %v598 = vsel %vm596, %v357, 0
    %v601 = vsel %vm596, %v358, 0
    %v604 = vsel %vm596, %v359, 0
    %v607 = vsel %vm596, %v360, 0
    %v610 = vsel %vm596, %v361, 0
    %v613 = vsel %vm596, %v362, 0
    %v616 = vsel %vm596, %v363, 0
    %v619 = vsel %vm596, %v364, 0
    %v622 = vsel %vm596, %v365, 0
    %v625 = vsel %vm596, %v366, 0
    %v628 = vsel %vm596, %v367, 0
    %v631 = vsel %vm596, %v368, 0
    %v634 = vsel %vm596, %v369, 0
    %v637 = vsel %vm596, %v370, 0
    %v640 = vsel %vm596, %v371, 0
    %v643 = vsel %vm596, %v372, 0
    %vm645 = vcmask 1040384
    %v647 = vsel %vm645, %v381, 0
    %649 = vmatprep.subr.mxu0 0.0
    %650 = vmatpush1.msra.mxu0 0.0
    %651 = vmatprep.subr.mxu0 0.0
    %652 = vmatpush1.msra.mxu0 0.0
    %653 = vmatprep.subr.mxu0 0.0
    %654 = vmatpush1.msra.mxu0 0.0
    %655 = vmatprep.subr.mxu0 0.0
    %656 = vmatpush1.msra.mxu0 0.0
    %657 = vmatprep.subr.mxu0 0.0
    %658 = vmatpush1.msra.mxu0 0.0
    %659 = vmatprep.subr.mxu0 0.0
    %660 = vmatpush1.msra.mxu0 0.0
    %661 = vmatprep.subr.mxu0 0.0
    %662 = vmatpush1.msra.mxu0 0.0
    %663 = vmatprep.subr.mxu0 0.0
    %664 = vmatpush1.msra.mxu0 %v647
    %665 = vmatprep.subr.mxu0 0.0
    %666 = vmatpush1.msra.mxu0 %v380
    %667 = vmatprep.subr.mxu0 0.0
    %668 = vmatpush1.msra.mxu0 %v379
    %669 = vmatprep.subr.mxu0 0.0
    %670 = vmatpush1.msra.mxu0 %v378
    %671 = vmatprep.subr.mxu0 0.0
    %672 = vmatpush1.msra.mxu0 %v377
    %673 = vmatprep.subr.mxu0 0.0
    %674 = vmatpush1.msra.mxu0 %v376
    %675 = vmatprep.subr.mxu0 0.0
    %676 = vmatpush1.msra.mxu0 %v375
    %677 = vmatprep.subr.mxu0 0.0
    %678 = vmatpush1.msra.mxu0 %v374
    %679 = vmatprep.subr.mxu0 0.0
    %680 = vmatpush1.msra.mxu0 %v373
    %681 = vmatprep.subr.mxu0 0.0
    %682 = vmatpush2.msra.mxu0 0.0
    %683 = vmatprep.subr.mxu0 0.0
    %684 = vmatpush2.msra.mxu0 0.0
    %685 = vmatprep.subr.mxu0 0.0
    %686 = vmatpush2.msra.mxu0 0.0
    %687 = vmatprep.subr.mxu0 0.0
    %688 = vmatpush2.msra.mxu0 0.0
    %689 = vmatprep.subr.mxu0 0.0
    %690 = vmatpush2.msra.mxu0 0.0
    %691 = vmatprep.subr.mxu0 0.0
    %692 = vmatpush2.msra.mxu0 0.0
    %693 = vmatprep.subr.mxu0 0.0
    %694 = vmatpush2.msra.mxu0 0.0
    %695 = vmatprep.subr.mxu0 0.0
    %696 = vmatpush2.msra.mxu0 0.0
    %697 = vmatprep.subr.mxu0 0.0
    %698 = vmatpush2.msra.mxu0 0.0
    %699 = vmatprep.subr.mxu0 0.0
    %700 = vmatpush2.msra.mxu0 0.0
    %701 = vmatprep.subr.mxu0 0.0
    %702 = vmatpush2.msra.mxu0 0.0
    %703 = vmatprep.subr.mxu0 0.0
    %704 = vmatpush2.msra.mxu0 0.0
    %705 = vmatprep.subr.mxu0 0.0
    %706 = vmatpush2.msra.mxu0 0.0
    %707 = vmatprep.subr.mxu0 0.0
    %708 = vmatpush2.msra.mxu0 0.0
    %709 = vmatprep.subr.mxu0 0.0
    %710 = vmatpush2.msra.mxu0 0.0
    %711 = vmatprep.subr.mxu0 0.0
    %712 = vmatpush2.msra.mxu0 0.0
    %713 = vmatprep.mubr.f32.mxu0 0.0
    %714 = vmatmul.mubr.f32.gmra.mxu0 %v598
    %v715 = vpop.f32.mrf.mxu0
    %v716 = vadd.f32 %v518, %v715
    %v717 = vpop.f32.mrf.mxu0
    %718 = vmatprep.mubr.f32.mxu0 0.0
    %719 = vmatmul.mubr.f32.gmra.mxu0 %v601
    %v720 = vpop.f32.mrf.mxu0
    %v721 = vadd.f32 %v523, %v720
    %v722 = vpop.f32.mrf.mxu0
    %723 = vmatprep.mubr.f32.mxu0 0.0
    %724 = vmatmul.mubr.f32.gmra.mxu0 %v604
    %v725 = vpop.f32.mrf.mxu0
    %v726 = vadd.f32 %v528, %v725
    %v727 = vpop.f32.mrf.mxu0
    %728 = vmatprep.mubr.f32.mxu0 0.0
    %729 = vmatmul.mubr.f32.gmra.mxu0 %v607
    %v730 = vpop.f32.mrf.mxu0
    %v731 = vadd.f32 %v533, %v730
    %v732 = vpop.f32.mrf.mxu0
    %733 = vmatprep.mubr.f32.mxu0 0.0
    %734 = vmatmul.mubr.f32.gmra.mxu0 %v610
    %v735 = vpop.f32.mrf.mxu0
    %v736 = vadd.f32 %v538, %v735
    %v737 = vpop.f32.mrf.mxu0
    %738 = vmatprep.mubr.f32.mxu0 0.0
    %739 = vmatmul.mubr.f32.gmra.mxu0 %v613
    %v740 = vpop.f32.mrf.mxu0
    %v741 = vadd.f32 %v543, %v740
    %v742 = vpop.f32.mrf.mxu0
    %743 = vmatprep.mubr.f32.mxu0 0.0
    %744 = vmatmul.mubr.f32.gmra.mxu0 %v616
    %v745 = vpop.f32.mrf.mxu0
    %v746 = vadd.f32 %v548, %v745
    %v747 = vpop.f32.mrf.mxu0
    %748 = vmatprep.mubr.f32.mxu0 0.0
    %749 = vmatmul.mubr.f32.gmra.mxu0 %v619
    %v750 = vpop.f32.mrf.mxu0
    %v751 = vadd.f32 %v553, %v750
    %v752 = vpop.f32.mrf.mxu0
    %753 = vmatprep.mubr.f32.mxu0 0.0
    %754 = vmatmul.mubr.f32.gmra.mxu0 %v622
    %v755 = vpop.f32.mrf.mxu0
    %v756 = vadd.f32 %v558, %v755
    %v757 = vpop.f32.mrf.mxu0
    %758 = vmatprep.mubr.f32.mxu0 0.0
    %759 = vmatmul.mubr.f32.gmra.mxu0 %v625
    %v760 = vpop.f32.mrf.mxu0
    %v761 = vadd.f32 %v563, %v760
    %v762 = vpop.f32.mrf.mxu0
    %763 = vmatprep.mubr.f32.mxu0 0.0
    %764 = vmatmul.mubr.f32.gmra.mxu0 %v628
    %v765 = vpop.f32.mrf.mxu0
    %v766 = vadd.f32 %v568, %v765
    %v767 = vpop.f32.mrf.mxu0
    %768 = vmatprep.mubr.f32.mxu0 0.0
    %769 = vmatmul.mubr.f32.gmra.mxu0 %v631
    %v770 = vpop.f32.mrf.mxu0
    %v771 = vadd.f32 %v573, %v770
    %v772 = vpop.f32.mrf.mxu0
    %773 = vmatprep.mubr.f32.mxu0 0.0
    %774 = vmatmul.mubr.f32.gmra.mxu0 %v634
    %v775 = vpop.f32.mrf.mxu0
    %v776 = vadd.f32 %v578, %v775
    %v777 = vpop.f32.mrf.mxu0
    %778 = vmatprep.mubr.f32.mxu0 0.0
    %779 = vmatmul.mubr.f32.gmra.mxu0 %v637
    %v780 = vpop.f32.mrf.mxu0
    %v781 = vadd.f32 %v583, %v780
    %v782 = vpop.f32.mrf.mxu0
    %783 = vmatprep.mubr.f32.mxu0 0.0
    %784 = vmatmul.mubr.f32.gmra.mxu0 %v640
    %v785 = vpop.f32.mrf.mxu0
    %v786 = vadd.f32 %v588, %v785
    %v787 = vpop.f32.mrf.mxu0
    %788 = vmatprep.mubr.f32.mxu0 0.0
    %789 = vmatmul.mubr.f32.gmra.mxu0 %v643
    %v790 = vpop.f32.mrf.mxu0
    %v791 = vadd.f32 %v593, %v790
    %v792 = vpop.f32.mrf.mxu0
    %793 = vdwg.mxu0
    %v794 = vld [vmem:[%s4] sm:$0x1]
    %v796 = vlaneseq
    %v797 = vshrl.u32 %v796, 7
    %v798 = vsub.s32 0, %v797
    %v799 = vrot.slane %v794, %v798
    %v801 = vadd.f32 %v716, %v799
    %v802 = vadd.f32 %v721, %v799
    %v803 = vadd.f32 %v726, %v799
    %v804 = vadd.f32 %v731, %v799
    %v805 = vadd.f32 %v736, %v799
    %v806 = vadd.f32 %v741, %v799
    %v807 = vadd.f32 %v746, %v799
    %v808 = vadd.f32 %v751, %v799
    %v809 = vadd.f32 %v756, %v799
    %v810 = vadd.f32 %v761, %v799
    %v811 = vadd.f32 %v766, %v799
    %v812 = vadd.f32 %v771, %v799
    %v813 = vadd.f32 %v776, %v799
    %v814 = vadd.f32 %v781, %v799
    %v815 = vadd.f32 %v786, %v799
    %v816 = vadd.f32 %v791, %v799
    %v817 = vmax.f32 %v801, 0.0
    %v818 = vmax.f32 %v802, 0.0
    %v819 = vmax.f32 %v803, 0.0
    %v820 = vmax.f32 %v804, 0.0
    %v821 = vmax.f32 %v805, 0.0
    %v822 = vmax.f32 %v806, 0.0
    %v823 = vmax.f32 %v807, 0.0
    %v824 = vmax.f32 %v808, 0.0
    %v825 = vmax.f32 %v809, 0.0
    %v826 = vmax.f32 %v810, 0.0
    %v827 = vmax.f32 %v811, 0.0
    %v828 = vmax.f32 %v812, 0.0
    %v829 = vmax.f32 %v813, 0.0
    %v830 = vmax.f32 %v814, 0.0
    %v831 = vmax.f32 %v815, 0.0
    %v832 = vmax.f32 %v816, 0.0
    %v833 = vld [vmem:[%s5] sm:$0xff]
    %v834 = vld [vmem:[%s5 + $0x8] sm:$0xff]
    %v835 = vld [vmem:[%s5 + $0x10] sm:$0xff]
    %v836 = vld [vmem:[%s5 + $0x18] sm:$0xff]
    %v837 = vld [vmem:[%s5 + $0x20] sm:$0xff]
    %v838 = vld [vmem:[%s5 + $0x28] sm:$0xff]
    %v839 = vld [vmem:[%s5 + $0x30] sm:$0xff]
    %v840 = vld [vmem:[%s5 + $0x38] sm:$0xff]
    %v841 = vld [vmem:[%s5 + $0x40] sm:$0xff]
    %v842 = vld [vmem:[%s5 + $0x48] sm:$0xff]
    %v843 = vld [vmem:[%s5 + $0x50] sm:$0xff]
    %v844 = vld [vmem:[%s5 + $0x58] sm:$0xff]
    %v845 = vld [vmem:[%s5 + $0x60] sm:$0xff]
    %v846 = vld [vmem:[%s5 + $0x68] sm:$0xff]
    %v847 = vld [vmem:[%s5 + $0x70] sm:$0xff]
    %v848 = vld [vmem:[%s5 + $0x78] sm:$0xff]
    %v849 = vld [vmem:[%s6] sm:$0x1]
    %v851 = vlaneseq
    %v852 = vshrl.u32 %v851, 7
    %v853 = vsub.s32 0, %v852
    %v854 = vrot.slane %v849, %v853
    %856 = vmatprep.subr.mxu0 0.0
    %857 = vmatpush1.msra.mxu0 %v848
    %858 = vmatprep.subr.mxu0 0.0
    %859 = vmatpush1.msra.mxu0 %v847
    %860 = vmatprep.subr.mxu0 0.0
    %861 = vmatpush1.msra.mxu0 %v846
    %862 = vmatprep.subr.mxu0 0.0
    %863 = vmatpush1.msra.mxu0 %v845
    %864 = vmatprep.subr.mxu0 0.0
    %865 = vmatpush1.msra.mxu0 %v844
    %866 = vmatprep.subr.mxu0 0.0
    %867 = vmatpush1.msra.mxu0 %v843
    %868 = vmatprep.subr.mxu0 0.0
    %869 = vmatpush1.msra.mxu0 %v842
    %870 = vmatprep.subr.mxu0 0.0
    %871 = vmatpush1.msra.mxu0 %v841
    %872 = vmatprep.subr.mxu0 0.0
    %873 = vmatpush1.msra.mxu0 %v840
    %874 = vmatprep.subr.mxu0 0.0
    %875 = vmatpush1.msra.mxu0 %v839
    %876 = vmatprep.subr.mxu0 0.0
    %877 = vmatpush1.msra.mxu0 %v838
    %878 = vmatprep.subr.mxu0 0.0
    %879 = vmatpush1.msra.mxu0 %v837
    %880 = vmatprep.subr.mxu0 0.0
    %881 = vmatpush1.msra.mxu0 %v836
    %882 = vmatprep.subr.mxu0 0.0
    %883 = vmatpush1.msra.mxu0 %v835
    %884 = vmatprep.subr.mxu0 0.0
    %885 = vmatpush1.msra.mxu0 %v834
    %886 = vmatprep.subr.mxu0 0.0
    %887 = vmatpush1.msra.mxu0 %v833
    %888 = vmatprep.subr.mxu0 0.0
    %889 = vmatpush2.msra.mxu0 0.0
    %890 = vmatprep.subr.mxu0 0.0
    %891 = vmatpush2.msra.mxu0 0.0
    %892 = vmatprep.subr.mxu0 0.0
    %893 = vmatpush2.msra.mxu0 0.0
    %894 = vmatprep.subr.mxu0 0.0
    %895 = vmatpush2.msra.mxu0 0.0
    %896 = vmatprep.subr.mxu0 0.0
    %897 = vmatpush2.msra.mxu0 0.0
    %898 = vmatprep.subr.mxu0 0.0
    %899 = vmatpush2.msra.mxu0 0.0
    %900 = vmatprep.subr.mxu0 0.0
    %901 = vmatpush2.msra.mxu0 0.0
    %902 = vmatprep.subr.mxu0 0.0
    %903 = vmatpush2.msra.mxu0 0.0
    %904 = vmatprep.subr.mxu0 0.0
    %905 = vmatpush2.msra.mxu0 0.0
    %906 = vmatprep.subr.mxu0 0.0
    %907 = vmatpush2.msra.mxu0 0.0
    %908 = vmatprep.subr.mxu0 0.0
    %909 = vmatpush2.msra.mxu0 0.0
    %910 = vmatprep.subr.mxu0 0.0
    %911 = vmatpush2.msra.mxu0 0.0
    %912 = vmatprep.subr.mxu0 0.0
    %913 = vmatpush2.msra.mxu0 0.0
    %914 = vmatprep.subr.mxu0 0.0
    %915 = vmatpush2.msra.mxu0 0.0
    %916 = vmatprep.subr.mxu0 0.0
    %917 = vmatpush2.msra.mxu0 0.0
    %918 = vmatprep.subr.mxu0 0.0
    %919 = vmatpush2.msra.mxu0 0.0
    %920 = vmatprep.mubr.f32.mxu0 0.0
    %921 = vmatmul.mubr.f32.gmra.mxu0 %v817
    %v922 = vpop.f32.mrf.mxu0
    %v923 = vadd.f32 %v854, %v922
    %v924 = vpop.f32.mrf.mxu0
    %925 = vmatprep.mubr.f32.mxu0 0.0
    %926 = vmatmul.mubr.f32.gmra.mxu0 %v818
    %v927 = vpop.f32.mrf.mxu0
    %v928 = vadd.f32 %v854, %v927
    %v929 = vpop.f32.mrf.mxu0
    %930 = vmatprep.mubr.f32.mxu0 0.0
    %931 = vmatmul.mubr.f32.gmra.mxu0 %v819
    %v932 = vpop.f32.mrf.mxu0
    %v933 = vadd.f32 %v854, %v932
    %v934 = vpop.f32.mrf.mxu0
    %935 = vmatprep.mubr.f32.mxu0 0.0
    %936 = vmatmul.mubr.f32.gmra.mxu0 %v820
    %v937 = vpop.f32.mrf.mxu0
    %v938 = vadd.f32 %v854, %v937
    %v939 = vpop.f32.mrf.mxu0
    %940 = vmatprep.mubr.f32.mxu0 0.0
    %941 = vmatmul.mubr.f32.gmra.mxu0 %v821
    %v942 = vpop.f32.mrf.mxu0
    %v943 = vadd.f32 %v854, %v942
    %v944 = vpop.f32.mrf.mxu0
    %945 = vmatprep.mubr.f32.mxu0 0.0
    %946 = vmatmul.mubr.f32.gmra.mxu0 %v822
    %v947 = vpop.f32.mrf.mxu0
    %v948 = vadd.f32 %v854, %v947
    %v949 = vpop.f32.mrf.mxu0
    %950 = vmatprep.mubr.f32.mxu0 0.0
    %951 = vmatmul.mubr.f32.gmra.mxu0 %v823
    %v952 = vpop.f32.mrf.mxu0
    %v953 = vadd.f32 %v854, %v952
    %v954 = vpop.f32.mrf.mxu0
    %955 = vmatprep.mubr.f32.mxu0 0.0
    %956 = vmatmul.mubr.f32.gmra.mxu0 %v824
    %v957 = vpop.f32.mrf.mxu0
    %v958 = vadd.f32 %v854, %v957
    %v959 = vpop.f32.mrf.mxu0
    %960 = vmatprep.mubr.f32.mxu0 0.0
    %961 = vmatmul.mubr.f32.gmra.mxu0 %v825
    %v962 = vpop.f32.mrf.mxu0
    %v963 = vadd.f32 %v854, %v962
    %v964 = vpop.f32.mrf.mxu0
    %965 = vmatprep.mubr.f32.mxu0 0.0
    %966 = vmatmul.mubr.f32.gmra.mxu0 %v826
    %v967 = vpop.f32.mrf.mxu0
    %v968 = vadd.f32 %v854, %v967
    %v969 = vpop.f32.mrf.mxu0
    %970 = vmatprep.mubr.f32.mxu0 0.0
    %971 = vmatmul.mubr.f32.gmra.mxu0 %v827
    %v972 = vpop.f32.mrf.mxu0
    %v973 = vadd.f32 %v854, %v972
    %v974 = vpop.f32.mrf.mxu0
    %975 = vmatprep.mubr.f32.mxu0 0.0
    %976 = vmatmul.mubr.f32.gmra.mxu0 %v828
    %v977 = vpop.f32.mrf.mxu0
    %v978 = vadd.f32 %v854, %v977
    %v979 = vpop.f32.mrf.mxu0
    %980 = vmatprep.mubr.f32.mxu0 0.0
    %981 = vmatmul.mubr.f32.gmra.mxu0 %v829
    %v982 = vpop.f32.mrf.mxu0
    %v983 = vadd.f32 %v854, %v982
    %v984 = vpop.f32.mrf.mxu0
    %985 = vmatprep.mubr.f32.mxu0 0.0
    %986 = vmatmul.mubr.f32.gmra.mxu0 %v830
    %v987 = vpop.f32.mrf.mxu0
    %v988 = vadd.f32 %v854, %v987
    %v989 = vpop.f32.mrf.mxu0
    %990 = vmatprep.mubr.f32.mxu0 0.0
    %991 = vmatmul.mubr.f32.gmra.mxu0 %v831
    %v992 = vpop.f32.mrf.mxu0
    %v993 = vadd.f32 %v854, %v992
    %v994 = vpop.f32.mrf.mxu0
    %995 = vmatprep.mubr.f32.mxu0 0.0
    %996 = vmatmul.mubr.f32.gmra.mxu0 %v832
    %v997 = vpop.f32.mrf.mxu0
    %v998 = vadd.f32 %v854, %v997
    %v999 = vpop.f32.mrf.mxu0
    %1000 = vdwg.mxu0
    %v1001 = vmax.f32 %v923, 0.0
    %v1002 = vmax.f32 %v928, 0.0
    %v1003 = vmax.f32 %v933, 0.0
    %v1004 = vmax.f32 %v938, 0.0
    %v1005 = vmax.f32 %v943, 0.0
    %v1006 = vmax.f32 %v948, 0.0
    %v1007 = vmax.f32 %v953, 0.0
    %v1008 = vmax.f32 %v958, 0.0
    %v1009 = vmax.f32 %v963, 0.0
    %v1010 = vmax.f32 %v968, 0.0
    %v1011 = vmax.f32 %v973, 0.0
    %v1012 = vmax.f32 %v978, 0.0
    %v1013 = vmax.f32 %v983, 0.0
    %v1014 = vmax.f32 %v988, 0.0
    %v1015 = vmax.f32 %v993, 0.0
    %v1016 = vmax.f32 %v998, 0.0
    %v1017 = vld [vmem:[%s7] sm:$0x1]
    %v1018 = vld [vmem:[#allocation2] sm:$0x1]
    %1020 = vset.pattern.permute.xlu0 0
    %1021 = vperm.xlu0 %1020, %v1018
    %v1022 = vpop.permute.xlu0 %1021
    %v1024 = vlaneseq
    %v1025 = vshrl.u32 %v1024, 7
    %v1026 = vsub.s32 0, %v1025
    %v1027 = vrot.slane %v1022, %v1026
    %v1029 = vsel %vm402, %v1017, 0
    %v1032 = vsel %vm402, %v1001, 0
    %v1035 = vsel %vm402, %v1002, 0
    %v1038 = vsel %vm402, %v1003, 0
    %v1041 = vsel %vm402, %v1004, 0
    %v1044 = vsel %vm402, %v1005, 0
    %v1047 = vsel %vm402, %v1006, 0
    %v1050 = vsel %vm402, %v1007, 0
    %v1053 = vsel %vm402, %v1008, 0
    %v1056 = vsel %vm402, %v1009, 0
    %v1059 = vsel %vm402, %v1010, 0
    %v1062 = vsel %vm402, %v1011, 0
    %v1065 = vsel %vm402, %v1012, 0
    %v1068 = vsel %vm402, %v1013, 0
    %v1071 = vsel %vm402, %v1014, 0
    %v1074 = vsel %vm402, %v1015, 0
    %v1077 = vsel %vm402, %v1016, 0
    %1079 = vmatprep.subr.mxu0 0.0
    %1080 = vmatpush1.xpose.msra.mxu0 %v1077
    %1081 = vmatprep.subr.mxu0 0.0
    %1082 = vmatpush1.xpose.msra.mxu0 %v1074
    %1083 = vmatprep.subr.mxu0 0.0
    %1084 = vmatpush1.xpose.msra.mxu0 %v1071
    %1085 = vmatprep.subr.mxu0 0.0
    %1086 = vmatpush1.xpose.msra.mxu0 %v1068
    %1087 = vmatprep.subr.mxu0 0.0
    %1088 = vmatpush1.xpose.msra.mxu0 %v1065
    %1089 = vmatprep.subr.mxu0 0.0
    %1090 = vmatpush1.xpose.msra.mxu0 %v1062
    %1091 = vmatprep.subr.mxu0 0.0
    %1092 = vmatpush1.xpose.msra.mxu0 %v1059
    %1093 = vmatprep.subr.mxu0 0.0
    %1094 = vmatpush1.xpose.msra.mxu0 %v1056
    %1095 = vmatprep.subr.mxu0 0.0
    %1096 = vmatpush1.xpose.msra.mxu0 %v1053
    %1097 = vmatprep.subr.mxu0 0.0
    %1098 = vmatpush1.xpose.msra.mxu0 %v1050
    %1099 = vmatprep.subr.mxu0 0.0
    %1100 = vmatpush1.xpose.msra.mxu0 %v1047
    %1101 = vmatprep.subr.mxu0 0.0
    %1102 = vmatpush1.xpose.msra.mxu0 %v1044
    %1103 = vmatprep.subr.mxu0 0.0
    %1104 = vmatpush1.xpose.msra.mxu0 %v1041
    %1105 = vmatprep.subr.mxu0 0.0
    %1106 = vmatpush1.xpose.msra.mxu0 %v1038
    %1107 = vmatprep.subr.mxu0 0.0
    %1108 = vmatpush1.xpose.msra.mxu0 %v1035
    %1109 = vmatprep.subr.mxu0 0.0
    %1110 = vmatpush1.xpose.msra.mxu0 %v1032
    %1111 = vmatprep.subr.mxu0 0.0
    %1112 = vmatpush2.xpose.msra.mxu0 0.0
    %1113 = vmatprep.subr.mxu0 0.0
    %1114 = vmatpush2.xpose.msra.mxu0 0.0
    %1115 = vmatprep.subr.mxu0 0.0
    %1116 = vmatpush2.xpose.msra.mxu0 0.0
    %1117 = vmatprep.subr.mxu0 0.0
    %1118 = vmatpush2.xpose.msra.mxu0 0.0
    %1119 = vmatprep.subr.mxu0 0.0
    %1120 = vmatpush2.xpose.msra.mxu0 0.0
    %1121 = vmatprep.subr.mxu0 0.0
    %1122 = vmatpush2.xpose.msra.mxu0 0.0
    %1123 = vmatprep.subr.mxu0 0.0
    %1124 = vmatpush2.xpose.msra.mxu0 0.0
    %1125 = vmatprep.subr.mxu0 0.0
    %1126 = vmatpush2.xpose.msra.mxu0 0.0
    %1127 = vmatprep.subr.mxu0 0.0
    %1128 = vmatpush2.xpose.msra.mxu0 0.0
    %1129 = vmatprep.subr.mxu0 0.0
    %1130 = vmatpush2.xpose.msra.mxu0 0.0
    %1131 = vmatprep.subr.mxu0 0.0
    %1132 = vmatpush2.xpose.msra.mxu0 0.0
    %1133 = vmatprep.subr.mxu0 0.0
    %1134 = vmatpush2.xpose.msra.mxu0 0.0
    %1135 = vmatprep.subr.mxu0 0.0
    %1136 = vmatpush2.xpose.msra.mxu0 0.0
    %1137 = vmatprep.subr.mxu0 0.0
    %1138 = vmatpush2.xpose.msra.mxu0 0.0
    %1139 = vmatprep.subr.mxu0 0.0
    %1140 = vmatpush2.xpose.msra.mxu0 0.0
    %1141 = vmatprep.subr.mxu0 0.0
    %1142 = vmatpush2.xpose.msra.mxu0 0.0
    %1143 = vmatprep.mubr.f32.mxu0 0.0
    %1144 = vmatmul.mubr.f32.gmra.mxu0 %v1029
    %v1145 = vpop.f32.mrf.mxu0
    %v1146 = vadd.f32 %v1027, %v1145
    %v1147 = vpop.f32.mrf.mxu0
    %1148 = vdwg.mxu0
    %1149 = vst [vmem:[#allocation3] sm:$0x1] %v1146
    // Predicated region
    $region38: #{tpu_custom_call.1} parent=1 // pred_check
      _
    $region39: #{tpu_custom_call.1} parent=1 // pred_check_branch
      %1151 = sbr.rel (0) target = $region41
    $region40: #{tpu_custom_call.1} parent=1 // pred_region
      %s1153 = ssub.s32 16, 16
      %1154 = vsyncadd [#allocation4], %s1153
      %s1156 = sshll.u32 [#allocation3], 4
      %s1157 = int_to_ptr.vmem [resolvable:$true] %s1156
      %1159 = dma.vmem_to_hbm [thread:$0]  %s1157, 16, %s9, [#allocation4]
    $region41: #{tpu_custom_call.1} parent=1 // pred_fallthru
      _
    // Predicated region
    $region42: #{tpu_custom_call.1} parent=1 // pred_check
      _
    $region43: #{tpu_custom_call.1} parent=1 // pred_check_branch
      %1161 = sbr.rel (0) target = $region45
    $region44: #{tpu_custom_call.1} parent=1 // pred_region
      %1162 = dma.done [#allocation4], 16
    $region45: #{tpu_custom_call.1} parent=1 // pred_fallthru
      _
    %1163 = vsyncpa [#allocation4], 1

</llo_original>
